<compile_context>
chip_gen: v6e
topology: v6e:2x2x1
jax: 0.10.0
libtpu: 0.0.40
codegen_flags: <defaults>
</compile_context>

<pallas_src>
import math
import numpy as np
import jax
import jax.numpy as jnp
from jax.experimental import pallas as pl
from jax.experimental.pallas import tpu as pltpu


def _round_up(x, m):
    return ((x + m - 1) // m) * m


def _make_kernel(num_levels, chunked, offsets, sizes, sample):
    """Fused kernel: per-level pooling (streamed over HW chunks) -> accumulator
    at static lane offsets -> one-shot matmul + bias at the last reduction step."""
    assert sample in ("mean", "max")

    def kernel(*refs):
        x_refs = refs[:num_levels]           # level i: (b_tile, C_i, hw_block_i)
        w_ref = refs[num_levels]              # (C_total, L*E) f32 block-diagonal
        b_ref = refs[num_levels + 1]          # (1, L*E) f32
        s_ref = refs[num_levels + 2]          # (1, C_total) f32 per-channel scale
        o_ref = refs[num_levels + 3]          # (b_tile, L*E) f32
        acc_ref = refs[num_levels + 4]        # (b_tile, C_total) f32 scratch

        k = pl.program_id(1)
        last = pl.num_programs(1) - 1

        def pool(x):
            xf = x.astype(jnp.float32)        # f32 accumulate; v5e has no bf16 VPU
            if sample == "mean":
                return jnp.sum(xf, axis=-1)
            return jnp.max(xf, axis=-1)

        # First reduction step: write every level's pool (first chunk for the
        # chunked levels, full array for the resident ones).
        @pl.when(k == 0)
        def _init():
            for i in range(num_levels):
                acc_ref[:, offsets[i]:offsets[i] + sizes[i]] = pool(x_refs[i][...])

        # Subsequent steps: combine only the streamed (chunked) levels.
        if any(chunked):
            @pl.when(k > 0)
            def _accumulate():
                for i in range(num_levels):
                    if not chunked[i]:
                        continue
                    part = pool(x_refs[i][...])
                    cur = acc_ref[:, offsets[i]:offsets[i] + sizes[i]]
                    if sample == "mean":
                        acc_ref[:, offsets[i]:offsets[i] + sizes[i]] = cur + part
                    else:
                        acc_ref[:, offsets[i]:offsets[i] + sizes[i]] = jnp.maximum(cur, part)

        # Finalize: per-channel 1/HW scale, single MXU matmul, lane-dense store.
        @pl.when(k == last)
        def _finalize():
            p = acc_ref[...] * s_ref[...]
            o_ref[...] = (
                jnp.dot(p, w_ref[...], preferred_element_type=jnp.float32)
                + b_ref[...]
            )

    return kernel


class VisualBaseMulti:
    """Pallas-TPU Visual_base_multi (mapping='linear', sample in {'mean','max'})."""

    def __init__(self, params, sample="mean", hw_tile=512, b_tile=8):
        assert sample in ("mean", "max")
        self.sample = sample
        self.hw_tile = int(hw_tile)
        self.b_tile_max = int(b_tile)
        self.num_levels = len(params)
        self.cs = [int(w.shape[0]) for (w, _) in params]
        self.E = int(params[0][0].shape[1])
        self.c_total = sum(self.cs)
        self.n_out = self.num_levels * self.E
        self.offsets = [int(o) for o in np.cumsum([0] + self.cs[:-1])]

        # ---- hoisted, built ONCE at init (no per-call device ops) ----
        w_big = np.zeros((self.c_total, self.n_out), np.float32)
        biases = []
        for i, (w, b) in enumerate(params):
            w_big[self.offsets[i]:self.offsets[i] + self.cs[i],
                  i * self.E:(i + 1) * self.E] = np.asarray(w, np.float32)
            biases.append(np.asarray(b, np.float32).reshape(1, -1))
        self.w_big = jnp.asarray(w_big)                       # (C_total, L*E)
        self.bias = jnp.asarray(np.concatenate(biases, -1))   # (1, L*E)
        self._cache = {}

    # --------------------------------------------------------------
    def _build(self, shapes, dtypes):
        B = int(shapes[0][0])
        hws = [int(s[2] * s[3]) for s in shapes]
        b_tile = B if B <= self.b_tile_max else self.b_tile_max
        n_b = pl.cdiv(B, b_tile)

        hw_max = max(hws)
        n_k = 1
        if self.hw_tile % 128 == 0 and hw_max > self.hw_tile and hw_max % self.hw_tile == 0:
            n_k = hw_max // self.hw_tile
        # TODO(synk): HW extents that don't divide into 128-multiple chunks fall
        # back to whole-array residency for that level (fine for pyramid tails).
        chunked, hw_blocks = [], []
        for hw in hws:
            if n_k > 1 and hw % n_k == 0 and (hw // n_k) % 128 == 0:
                chunked.append(True)
                hw_blocks.append(hw // n_k)
            else:
                chunked.append(False)
                hw_blocks.append(hw)

        # Per-channel finalize scale (1/HW for mean) -> baked jit constant.
        if self.sample == "mean":
            scale_np = np.concatenate(
                [np.full((c,), 1.0 / hw, np.float32) for c, hw in zip(self.cs, hws)])
        else:
            scale_np = np.ones((self.c_total,), np.float32)
        scale = jnp.asarray(scale_np.reshape(1, -1))

        # BlockSpecs: streamed levels tile HW; resident levels stay in VMEM
        # across the reduction axis (constant block index => fetched once).
        in_specs = []
        for i, (c, hwb) in enumerate(zip(self.cs, hw_blocks)):
            if chunked[i]:
                idx = lambda b, k: (b, 0, k)
            else:
                idx = lambda b, k: (b, 0, 0)
            in_specs.append(pl.BlockSpec((b_tile, c, hwb), idx))
        in_specs += [
            pl.BlockSpec((self.c_total, self.n_out), lambda b, k: (0, 0)),
            pl.BlockSpec((1, self.n_out), lambda b, k: (0, 0)),
            pl.BlockSpec((1, self.c_total), lambda b, k: (0, 0)),
        ]
        out_spec = pl.BlockSpec((b_tile, self.n_out), lambda b, k: (b, 0))

        # Explicit VMEM budget (double-buffered input tiles + constants + acc + out).
        need = 0
        for c, hwb, dt in zip(self.cs, hw_blocks, dtypes):
            need += 2 * b_tile * _round_up(c, 8) * _round_up(hwb, 128) * int(np.dtype(dt).itemsize)
        need += (_round_up(self.c_total, 8) * _round_up(self.n_out, 128)
                 + 8 * _round_up(self.n_out, 128)
                 + 8 * _round_up(self.c_total, 128)) * 4
        need += (2 * b_tile * _round_up(self.n_out, 128)
                 + _round_up(b_tile, 8) * _round_up(self.c_total, 128)) * 4
        vmem_limit = int(min(max(2 * need + (1 << 20), 32 << 20), 64 << 20))

        flops = 2 * B * self.c_total * self.n_out + sum(
            B * c * hw for c, hw in zip(self.cs, hws))
        bytes_accessed = (
            sum(B * c * hw * int(np.dtype(dt).itemsize)
                for c, hw, dt in zip(self.cs, hws, dtypes))
            + (self.c_total * self.n_out + self.n_out + self.c_total + B * self.n_out) * 4)

        kern = _make_kernel(self.num_levels, tuple(chunked),
                            tuple(self.offsets), tuple(self.cs), self.sample)

        grid_spec = pltpu.PrefetchScalarGridSpec(
            num_scalar_prefetch=0,
            grid=(n_b, n_k),
            in_specs=in_specs,
            out_specs=out_spec,
            scratch_shapes=[pltpu.VMEM((b_tile, self.c_total), jnp.float32)],
        )
        call = pl.pallas_call(
            kern,
            out_shape=jax.ShapeDtypeStruct((B, self.n_out), jnp.float32),
            grid_spec=grid_spec,
            compiler_params=pltpu.CompilerParams(
                dimension_semantics=("parallel", "arbitrary"),
                vmem_limit_bytes=vmem_limit),
            cost_estimate=pl.CostEstimate(
                flops=flops, transcendentals=0, bytes_accessed=bytes_accessed),
        )

        w_big, bias = self.w_big, self.bias

        def fwd(*features):
            # NCHW -> (B, C, HW): metadata-only reshape, native dtype kept for DMA.
            flats = [f.reshape(f.shape[0], f.shape[1], -1) for f in features]
            return call(*flats, w_big, bias, scale)

        return jax.jit(fwd)

    # --------------------------------------------------------------
    def __call__(self, features, fused=False):
        key = tuple((tuple(map(int, f.shape)), str(f.dtype)) for f in features)
        fwd = self._cache.get(key)
        if fwd is None:
            fwd = self._build([f.shape for f in features], [f.dtype for f in features])
            self._cache[key] = fwd
        out = fwd(*features)
        if fused:
            return out  # lane-dense (B, L*E) slab for downstream consumers
        return [out[:, i * self.E:(i + 1) * self.E] for i in range(self.num_levels)]


def init_linear_params(key, in_features, out_features):
    """Deterministic init mirroring nn.Linear defaults (uniform +/- 1/sqrt(fan_in))."""
    kw, kb = jax.random.split(key)
    bound = 1.0 / math.sqrt(in_features)
    # PyTorch stores weight as (out, in); we keep it transposed as (in, out).
    w = jax.random.uniform(kw, (in_features, out_features), jnp.float32,
                           minval=-bound, maxval=bound)
    b = jax.random.uniform(kb, (1, out_features), jnp.float32,
                           minval=-bound, maxval=bound)
    return w, b


if __name__ == "__main__":
    # opt-equivalent small config
    channels = [4, 8, 16, 32]        # channels per pyramid level (c2..c5)
    embed_dim = 32
    sample = "mean"
    batch = 2
    spatials = [16, 8, 4, 2]         # H=W per level -> HW = 256, 64, 16, 4

    key = jax.random.PRNGKey(0)
    keys = jax.random.split(key, 2 * len(channels))

    # features in bf16 (halves HBM->VMEM bytes; kernel accumulates in f32)
    features = []
    for i, (c, s) in enumerate(zip(channels, spatials)):
        features.append(
            jax.random.normal(keys[i], (batch, c, s, s), dtype=jnp.bfloat16))

    # deterministic per-level Linear params
    params = [init_linear_params(keys[len(channels) + i], c, embed_dim)
              for i, c in enumerate(channels)]

    # hw_tile=128 so the largest level (HW=256) exercises the streamed
    # reduction-grid path; smaller levels stay VMEM-resident.
    module = VisualBaseMulti(params, sample=sample, hw_tile=128, b_tile=8)

    outs = module(features)
    outs = [jax.block_until_ready(o) for o in outs]

    # pure-JAX reference (matches the PyTorch 'linear'/'mean' branch)
    ok = True
    for x, (w, b), o in zip(features, params, outs):
        B, C, H, W = x.shape
        pooled = jnp.mean(x.astype(jnp.float32).reshape(B, C, H * W), axis=-1)
        ref = pooled @ w + b
        ok &= bool(np.allclose(np.asarray(o), np.asarray(ref), rtol=1e-3, atol=1e-4))
        assert o.shape == (batch, embed_dim)

    # also exercise the fused-slab return path
    fused = jax.block_until_ready(module(features, fused=True))
    assert fused.shape == (batch, len(channels) * embed_dim)

    if ok:
        print("KERNEL_OK")
    else:
        print("MISMATCH")
</pallas_src>

<mosaic_0001>
module attributes {stable_mosaic.version = 11 : i64} {
  func.func @kernel(%arg0: i32, %arg1: i32, %arg2: memref<2x4x128xbf16, #tpu.memory_space<vmem>>, %arg3: memref<2x8x64xbf16, #tpu.memory_space<vmem>>, %arg4: memref<2x16x16xbf16, #tpu.memory_space<vmem>>, %arg5: memref<2x32x4xbf16, #tpu.memory_space<vmem>>, %arg6: memref<60x128xf32, #tpu.memory_space<vmem>>, %arg7: memref<1x128xf32, #tpu.memory_space<vmem>>, %arg8: memref<1x60xf32, #tpu.memory_space<vmem>>, %arg9: memref<2x128xf32, #tpu.memory_space<vmem>>, %arg10: memref<2x60xf32, #tpu.memory_space<vmem>>) attributes {dimension_semantics = [#tpu.dimension_semantics<parallel>, #tpu.dimension_semantics<arbitrary>], iteration_bounds = array<i64: 1, 2>, scalar_prefetch = 0 : i64, scratch_operands = 1 : i64, tpu.core_type = #tpu.core_type<tc>, window_params = [{transform_indices = @transform_0, window_bounds = array<i64: 2, 4, 128>}, {transform_indices = @transform_1, window_bounds = array<i64: 2, 8, 64>}, {transform_indices = @transform_2, window_bounds = array<i64: 2, 16, 16>}, {transform_indices = @transform_3, window_bounds = array<i64: 2, 32, 4>}, {pipeline_mode = #tpu.pipeline_mode<synchronous>, transform_indices = @transform_4, window_bounds = array<i64: 60, 128>}, {pipeline_mode = #tpu.pipeline_mode<synchronous>, transform_indices = @transform_5, window_bounds = array<i64: 1, 128>}, {pipeline_mode = #tpu.pipeline_mode<synchronous>, transform_indices = @transform_6, window_bounds = array<i64: 1, 60>}, {transform_indices = @transform_7, window_bounds = array<i64: 2, 128>}]} {
    %c0_i32 = arith.constant 0 : i32
    %0 = arith.cmpi eq, %arg1, %c0_i32 : i32
    %1 = arith.extui %0 : i1 to i32
    %c0_i32_0 = arith.constant 0 : i32
    %2 = arith.cmpi ne, %1, %c0_i32_0 : i32
    scf.if %2 {
      %c0 = arith.constant 0 : index
      %c0_4 = arith.constant 0 : index
      %c0_5 = arith.constant 0 : index
      %9 = vector.load %arg2[%c0, %c0_4, %c0_5] : memref<2x4x128xbf16, #tpu.memory_space<vmem>>, vector<2x4x128xbf16>
      %10 = arith.extf %9 : vector<2x4x128xbf16> to vector<2x4x128xf32>
      %cst = arith.constant dense<0.000000e+00> : vector<2x4xf32>
      %11 = vector.multi_reduction <add>, %10, %cst [2] : vector<2x4x128xf32> to vector<2x4xf32>
      %c0_6 = arith.constant 0 : index
      %c0_7 = arith.constant 0 : index
      %12 = vector.load %arg10[%c0_6, %c0_7] : memref<2x60xf32, #tpu.memory_space<vmem>>, vector<2x4xf32>
      tpu.vector_store %arg10[%c0_6, %c0_7], %11 {strides = array<i32>} : memref<2x60xf32, #tpu.memory_space<vmem>>, vector<2x4xf32>,
      %c0_8 = arith.constant 0 : index
      %c0_9 = arith.constant 0 : index
      %c0_10 = arith.constant 0 : index
      %13 = vector.load %arg3[%c0_8, %c0_9, %c0_10] : memref<2x8x64xbf16, #tpu.memory_space<vmem>>, vector<2x8x64xbf16>
      %14 = arith.extf %13 : vector<2x8x64xbf16> to vector<2x8x64xf32>
      %cst_11 = arith.constant dense<0.000000e+00> : vector<2x8xf32>
      %15 = vector.multi_reduction <add>, %14, %cst_11 [2] : vector<2x8x64xf32> to vector<2x8xf32>
      %c0_12 = arith.constant 0 : index
      %c4 = arith.constant 4 : index
      %16 = vector.load %arg10[%c0_12, %c4] : memref<2x60xf32, #tpu.memory_space<vmem>>, vector<2x8xf32>
      tpu.vector_store %arg10[%c0_12, %c4], %15 {strides = array<i32>} : memref<2x60xf32, #tpu.memory_space<vmem>>, vector<2x8xf32>,
      %c0_13 = arith.constant 0 : index
      %c0_14 = arith.constant 0 : index
      %c0_15 = arith.constant 0 : index
      %17 = vector.load %arg4[%c0_13, %c0_14, %c0_15] : memref<2x16x16xbf16, #tpu.memory_space<vmem>>, vector<2x16x16xbf16>
      %18 = arith.extf %17 : vector<2x16x16xbf16> to vector<2x16x16xf32>
      %cst_16 = arith.constant dense<0.000000e+00> : vector<2x16xf32>
      %19 = vector.multi_reduction <add>, %18, %cst_16 [2] : vector<2x16x16xf32> to vector<2x16xf32>
      %c0_17 = arith.constant 0 : index
      %c12 = arith.constant 12 : index
      %20 = vector.load %arg10[%c0_17, %c12] : memref<2x60xf32, #tpu.memory_space<vmem>>, vector<2x16xf32>
      tpu.vector_store %arg10[%c0_17, %c12], %19 {strides = array<i32>} : memref<2x60xf32, #tpu.memory_space<vmem>>, vector<2x16xf32>,
      %c0_18 = arith.constant 0 : index
      %c0_19 = arith.constant 0 : index
      %c0_20 = arith.constant 0 : index
      %21 = vector.load %arg5[%c0_18, %c0_19, %c0_20] : memref<2x32x4xbf16, #tpu.memory_space<vmem>>, vector<2x32x4xbf16>
      %22 = arith.extf %21 : vector<2x32x4xbf16> to vector<2x32x4xf32>
      %cst_21 = arith.constant dense<0.000000e+00> : vector<2x32xf32>
      %23 = vector.multi_reduction <add>, %22, %cst_21 [2] : vector<2x32x4xf32> to vector<2x32xf32>
      %c0_22 = arith.constant 0 : index
      %c28 = arith.constant 28 : index
      %24 = vector.load %arg10[%c0_22, %c28] : memref<2x60xf32, #tpu.memory_space<vmem>>, vector<2x32xf32>
      tpu.vector_store %arg10[%c0_22, %c28], %23 {strides = array<i32>} : memref<2x60xf32, #tpu.memory_space<vmem>>, vector<2x32xf32>,
    } else {
    }
    %c0_i32_1 = arith.constant 0 : i32
    %3 = arith.cmpi sgt, %arg1, %c0_i32_1 : i32
    %4 = arith.extui %3 : i1 to i32
    %c0_i32_2 = arith.constant 0 : i32
    %5 = arith.cmpi ne, %4, %c0_i32_2 : i32
    scf.if %5 {
      %c0 = arith.constant 0 : index
      %c0_4 = arith.constant 0 : index
      %c0_5 = arith.constant 0 : index
      %9 = vector.load %arg2[%c0, %c0_4, %c0_5] : memref<2x4x128xbf16, #tpu.memory_space<vmem>>, vector<2x4x128xbf16>
      %10 = arith.extf %9 : vector<2x4x128xbf16> to vector<2x4x128xf32>
      %cst = arith.constant dense<0.000000e+00> : vector<2x4xf32>
      %11 = vector.multi_reduction <add>, %10, %cst [2] : vector<2x4x128xf32> to vector<2x4xf32>
      %c0_6 = arith.constant 0 : index
      %c0_7 = arith.constant 0 : index
      %12 = vector.load %arg10[%c0_6, %c0_7] : memref<2x60xf32, #tpu.memory_space<vmem>>, vector<2x4xf32>
      %13 = arith.addf %12, %11 : vector<2x4xf32>
      %c0_8 = arith.constant 0 : index
      %c0_9 = arith.constant 0 : index
      %14 = vector.load %arg10[%c0_8, %c0_9] : memref<2x60xf32, #tpu.memory_space<vmem>>, vector<2x4xf32>
      tpu.vector_store %arg10[%c0_8, %c0_9], %13 {strides = array<i32>} : memref<2x60xf32, #tpu.memory_space<vmem>>, vector<2x4xf32>,
    } else {
    }
    %c1_i32 = arith.constant 1 : i32
    %6 = arith.cmpi eq, %arg1, %c1_i32 : i32
    %7 = arith.extui %6 : i1 to i32
    %c0_i32_3 = arith.constant 0 : i32
    %8 = arith.cmpi ne, %7, %c0_i32_3 : i32
    scf.if %8 {
      %c0 = arith.constant 0 : index
      %c0_4 = arith.constant 0 : index
      %9 = vector.load %arg10[%c0, %c0_4] : memref<2x60xf32, #tpu.memory_space<vmem>>, vector<2x60xf32>
      %c0_5 = arith.constant 0 : index
      %c0_6 = arith.constant 0 : index
      %10 = vector.load %arg8[%c0_5, %c0_6] : memref<1x60xf32, #tpu.memory_space<vmem>>, vector<1x60xf32>
      %11 = vector.broadcast %10 : vector<1x60xf32> to vector<2x60xf32>
      %12 = arith.mulf %9, %11 : vector<2x60xf32>
      %c0_7 = arith.constant 0 : index
      %c0_8 = arith.constant 0 : index
      %13 = vector.load %arg6[%c0_7, %c0_8] : memref<60x128xf32, #tpu.memory_space<vmem>>, vector<60x128xf32>
      %cst = arith.constant dense<0.000000e+00> : vector<2x128xf32>
      %14 = tpu.matmul %12, %13, %cst {dimension_numbers = #tpu.dot_dimension_numbers<[1], [0], [0], [1], [0, 0, 1, 1], [], []>} : vector<2x60xf32>, vector<60x128xf32>, vector<2x128xf32> -> vector<2x128xf32>
      %c0_9 = arith.constant 0 : index
      %c0_10 = arith.constant 0 : index
      %15 = vector.load %arg7[%c0_9, %c0_10] : memref<1x128xf32, #tpu.memory_space<vmem>>, vector<1x128xf32>
      %16 = vector.broadcast %15 : vector<1x128xf32> to vector<2x128xf32>
      %17 = arith.addf %14, %16 : vector<2x128xf32>
      %c0_11 = arith.constant 0 : index
      %c0_12 = arith.constant 0 : index
      %18 = vector.load %arg9[%c0_11, %c0_12] : memref<2x128xf32, #tpu.memory_space<vmem>>, vector<2x128xf32>
      tpu.vector_store %arg9[%c0_11, %c0_12], %17 {strides = array<i32>} : memref<2x128xf32, #tpu.memory_space<vmem>>, vector<2x128xf32>,
    } else {
    }
    return
  }
  func.func @transform_0(%arg0: i32, %arg1: i32) -> (i32, i32, i32) {
    %c0_i32 = arith.constant 0 : i32
    %c0_i32_0 = arith.constant 0 : i32
    return %arg0, %c0_i32, %arg1 : i32, i32, i32
  }
  func.func @transform_1(%arg0: i32, %arg1: i32) -> (i32, i32, i32) {
    %c0_i32 = arith.constant 0 : i32
    %c0_i32_0 = arith.constant 0 : i32
    %c0_i32_1 = arith.constant 0 : i32
    return %arg0, %c0_i32, %c0_i32_0 : i32, i32, i32
  }
  func.func @transform_2(%arg0: i32, %arg1: i32) -> (i32, i32, i32) {
    %c0_i32 = arith.constant 0 : i32
    %c0_i32_0 = arith.constant 0 : i32
    %c0_i32_1 = arith.constant 0 : i32
    return %arg0, %c0_i32, %c0_i32_0 : i32, i32, i32
  }
  func.func @transform_3(%arg0: i32, %arg1: i32) -> (i32, i32, i32) {
    %c0_i32 = arith.constant 0 : i32
    %c0_i32_0 = arith.constant 0 : i32
    %c0_i32_1 = arith.constant 0 : i32
    return %arg0, %c0_i32, %c0_i32_0 : i32, i32, i32
  }
  func.func @transform_4(%arg0: i32, %arg1: i32) -> (i32, i32) {
    %c0_i32 = arith.constant 0 : i32
    %c0_i32_0 = arith.constant 0 : i32
    %c0_i32_1 = arith.constant 0 : i32
    return %c0_i32, %c0_i32_0 : i32, i32
  }
  func.func @transform_5(%arg0: i32, %arg1: i32) -> (i32, i32) {
    %c0_i32 = arith.constant 0 : i32
    %c0_i32_0 = arith.constant 0 : i32
    %c0_i32_1 = arith.constant 0 : i32
    return %c0_i32, %c0_i32_0 : i32, i32
  }
  func.func @transform_6(%arg0: i32, %arg1: i32) -> (i32, i32) {
    %c0_i32 = arith.constant 0 : i32
    %c0_i32_0 = arith.constant 0 : i32
    %c0_i32_1 = arith.constant 0 : i32
    return %c0_i32, %c0_i32_0 : i32, i32
  }
  func.func @transform_7(%arg0: i32, %arg1: i32) -> (i32, i32) {
    %c0_i32 = arith.constant 0 : i32
    %c0_i32_0 = arith.constant 0 : i32
    return %arg0, %c0_i32 : i32, i32
  }
}

</mosaic_0001>

<llo_original>
// kernel: fwd.1
$region0: #{fwd.1}
  #allocation0 [shape = 'u32[]', space=smem, size = 0x4, offset = 0x4, fixed_abs, tag = 'smem constant byte address 0x4 - core index']
  #allocation1 [shape = 'u32[144,128]{1,0:T(1,128)}', space=vmem, size = 0x12000, scoped, tag = 'internal scratch']
  #allocation2 [shape = 'f32[2,60]{1,0:T(2,128)}', space=vmem, size = 0x400, scoped, tag = 'scratch operand']
  %s0 = inlined_call_operand.vmem [shape: bf16[2,4,256], index: 0, kind: input, shape index: {}]
  %s1 = inlined_call_operand.vmem [shape: bf16[2,8,64], index: 1, kind: input, shape index: {}]
  %s2 = inlined_call_operand.vmem [shape: bf16[2,16,16], index: 2, kind: input, shape index: {}]
  %s3 = inlined_call_operand.vmem [shape: bf16[2,32,4], index: 3, kind: input, shape index: {}]
  %s4 = inlined_call_operand.vmem [shape: f32[60,128], index: 4, kind: input, shape index: {}]
  %s5 = inlined_call_operand.vmem [shape: f32[1,128], index: 5, kind: input, shape index: {}]
  %s6 = inlined_call_operand.vmem [shape: f32[1,60], index: 6, kind: input, shape index: {}]
  %s7 = inlined_call_operand.hbm [shape: f32[2,128], index: 7, kind: output, shape index: {}]
  %s8 = sld [smem:[#allocation0]]
  $region107: #{fwd.1} parent=0
    _
  %s10 = ssub.s32 1, %s8
  %s11 = scalar_select 0, %s10, %s8
  $region1: #{fwd.1} parent=0
    #allocation3 [shape = 'u8[4096]{0}', space=vmem, size = 0x1000, scoped, tag = 'input window, operand 0']
    #allocation4 [shape = 'u8[1024]{0}', space=vmem, size = 0x400, scoped, tag = 'output window, operand 0, single buffered']
    #allocation5 [shape = 's32[2]{0}', space=sflag, size = 0x8, scoped, tag = 'scoped memory for fwd.1']
    %12 = vsyncpa [#allocation5], 0
    loop: start=0, step=1, limit=4
    $region2: #{fwd.1} parent=1 // loop_pre_header
      _
    $region3: #{fwd.1} parent=1 // loop_header
      %s14 = sphi 0, %s18
      %p15 = scmp.ge.s32.totalorder %s14, 4
      %s21 = sphi 0, %s33
      %s22 = sphi 0, %s29
      %s23 = sphi 0, %s21
      %s24 = sphi 0, %s22
      %s25 = sphi 0, %s23
      %s26 = sphi 0, %s24
      %s38 = sphi 0, %s40
      %s41 = sphi 0, %s38
      %s42 = sphi 0, %s41
      %s58 = sphi 0, %s42
      %s64 = sphi 0, %s66
      %s67 = sphi 0, %s64
      %s68 = sphi 0, %s67
      %s84 = sphi 0, %s68
      %s90 = sphi 0, %s92
      %s93 = sphi 0, %s90
      %s94 = sphi 0, %s93
      %s110 = sphi 0, %s94
      %s116 = sphi 0, %s118
      %s119 = sphi 0, %s116
      %s120 = sphi 0, %s119
      %s136 = sphi 0, %s120
      %s140 = sphi 0, %s140
      %s142 = sphi 0, %s140
      %s143 = sphi 0, %s142
      %s157 = sphi 0, %s143
      %s161 = sphi 0, %s161
      %s163 = sphi 0, %s161
      %s164 = sphi 0, %s163
      %s178 = sphi 0, %s164
      %s182 = sphi 0, %s182
      %s184 = sphi 0, %s182
      %s185 = sphi 0, %s184
      %s199 = sphi 0, %s185
      %s205 = sphi 0, %s207
      %s208 = sphi 0, %s205
      %s209 = sphi 0, %s208
      %s225 = sphi 0, %s209
    $region4: #{fwd.1} parent=1 // loop_header_branch
      %17 = sbr.rel (%p15) target = $region8
    $region5: #{fwd.1} parent=1 // loop_body
      %s19 = ssub.s32 %s14, 1
      %s20 = ssub.s32 %s14, 2
      %s27 = sadd.s32 1, %s22
      %p28 = scmp.ge.s32.totalorder %s27, 2
      %s29 = scalar_select %p28, 0, %s27
      %s30 = sadd.s32 1, %s21
      %s31 = scalar_select %p28, %s30, %s21
      %p32 = scmp.ge.s32.totalorder %s31, 1
      %s33 = scalar_select %p32, 0, %s31
      %s34 = ssub.s32 %s21, %s33
      %s35 = ssub.s32 %s22, %s29
      %s36 = sor.u32 %s34, %s35
      %p37 = scmp.eq.s32.totalorder %s36, 0
      %s39 = sadd.s32 %s38, 1
      %s40 = scalar_select %p37, %s38, %s39
      %p43 = pneg %p37
      %p44 = scmp.eq.s32.totalorder %s14, 1
      %p45 = por %p43, %p44
      %p46 = scmp.ne.s32.totalorder %s38, %s41
      %p47 = scmp.eq.s32.totalorder %s14, 0
      %p48 = por %p46, %p47
      %p49 = scmp.ne.s32.totalorder %s38, %s41
      %p50 = scmp.eq.s32.totalorder %s19, 1
      %p51 = por %p49, %p50
      %p52 = scmp.ne.s32.totalorder %s41, %s42
      %p53 = scmp.eq.s32.totalorder %s19, 0
      %p54 = por %p52, %p53
      %p55 = scmp.ne.s32.totalorder %s41, %s42
      %p56 = scmp.eq.s32.totalorder %s20, 1
      %p57 = por %p55, %p56
      %p59 = scmp.ne.s32.totalorder %s42, %s58
      %p60 = scmp.eq.s32.totalorder %s20, 0
      %p61 = por %p59, %p60
      %s62 = ssub.s32 %s21, %s33
      %p63 = scmp.eq.s32.totalorder %s62, 0
      %s65 = sadd.s32 %s64, 1
      %s66 = scalar_select %p63, %s64, %s65
      %p69 = pneg %p63
      %p70 = scmp.eq.s32.totalorder %s14, 1
      %p71 = por %p69, %p70
      %p72 = scmp.ne.s32.totalorder %s64, %s67
      %p73 = scmp.eq.s32.totalorder %s14, 0
      %p74 = por %p72, %p73
      %p75 = scmp.ne.s32.totalorder %s64, %s67
      %p76 = scmp.eq.s32.totalorder %s19, 1
      %p77 = por %p75, %p76
      %p78 = scmp.ne.s32.totalorder %s67, %s68
      %p79 = scmp.eq.s32.totalorder %s19, 0
      %p80 = por %p78, %p79
      %p81 = scmp.ne.s32.totalorder %s67, %s68
      %p82 = scmp.eq.s32.totalorder %s20, 1
      %p83 = por %p81, %p82
      %p85 = scmp.ne.s32.totalorder %s68, %s84
      %p86 = scmp.eq.s32.totalorder %s20, 0
      %p87 = por %p85, %p86
      %s88 = ssub.s32 %s21, %s33
      %p89 = scmp.eq.s32.totalorder %s88, 0
      %s91 = sadd.s32 %s90, 1
      %s92 = scalar_select %p89, %s90, %s91
      %p95 = pneg %p89
      %p96 = scmp.eq.s32.totalorder %s14, 1
      %p97 = por %p95, %p96
      %p98 = scmp.ne.s32.totalorder %s90, %s93
      %p99 = scmp.eq.s32.totalorder %s14, 0
      %p100 = por %p98, %p99
      %p101 = scmp.ne.s32.totalorder %s90, %s93
      %p102 = scmp.eq.s32.totalorder %s19, 1
      %p103 = por %p101, %p102
      %p104 = scmp.ne.s32.totalorder %s93, %s94
      %p105 = scmp.eq.s32.totalorder %s19, 0
      %p106 = por %p104, %p105
      %p107 = scmp.ne.s32.totalorder %s93, %s94
      %p108 = scmp.eq.s32.totalorder %s20, 1
      %p109 = por %p107, %p108
      %p111 = scmp.ne.s32.totalorder %s94, %s110
      %p112 = scmp.eq.s32.totalorder %s20, 0
      %p113 = por %p111, %p112
      %s114 = ssub.s32 %s21, %s33
      %p115 = scmp.eq.s32.totalorder %s114, 0
      %s117 = sadd.s32 %s116, 1
      %s118 = scalar_select %p115, %s116, %s117
      %p121 = pneg %p115
      %p122 = scmp.eq.s32.totalorder %s14, 1
      %p123 = por %p121, %p122
      %p124 = scmp.ne.s32.totalorder %s116, %s119
      %p125 = scmp.eq.s32.totalorder %s14, 0
      %p126 = por %p124, %p125
      %p127 = scmp.ne.s32.totalorder %s116, %s119
      %p128 = scmp.eq.s32.totalorder %s19, 1
      %p129 = por %p127, %p128
      %p130 = scmp.ne.s32.totalorder %s119, %s120
      %p131 = scmp.eq.s32.totalorder %s19, 0
      %p132 = por %p130, %p131
      %p133 = scmp.ne.s32.totalorder %s119, %s120
      %p134 = scmp.eq.s32.totalorder %s20, 1
      %p135 = por %p133, %p134
      %p137 = scmp.ne.s32.totalorder %s120, %s136
      %p138 = scmp.eq.s32.totalorder %s20, 0
      %p139 = por %p137, %p138
      %s141 = sadd.s32 %s140, 1
      %p144 = scmp.eq.s32.totalorder %s14, 1
      %p145 = scmp.ne.s32.totalorder %s140, %s142
      %p146 = scmp.eq.s32.totalorder %s14, 0
      %p147 = por %p145, %p146
      %p148 = scmp.ne.s32.totalorder %s140, %s142
      %p149 = scmp.eq.s32.totalorder %s19, 1
      %p150 = por %p148, %p149
      %p151 = scmp.ne.s32.totalorder %s142, %s143
      %p152 = scmp.eq.s32.totalorder %s19, 0
      %p153 = por %p151, %p152
      %p154 = scmp.ne.s32.totalorder %s142, %s143
      %p155 = scmp.eq.s32.totalorder %s20, 1
      %p156 = por %p154, %p155
      %p158 = scmp.ne.s32.totalorder %s143, %s157
      %p159 = scmp.eq.s32.totalorder %s20, 0
      %p160 = por %p158, %p159
      %s162 = sadd.s32 %s161, 1
      %p165 = scmp.eq.s32.totalorder %s14, 1
      %p166 = scmp.ne.s32.totalorder %s161, %s163
      %p167 = scmp.eq.s32.totalorder %s14, 0
      %p168 = por %p166, %p167
      %p169 = scmp.ne.s32.totalorder %s161, %s163
      %p170 = scmp.eq.s32.totalorder %s19, 1
      %p171 = por %p169, %p170
      %p172 = scmp.ne.s32.totalorder %s163, %s164
      %p173 = scmp.eq.s32.totalorder %s19, 0
      %p174 = por %p172, %p173
      %p175 = scmp.ne.s32.totalorder %s163, %s164
      %p176 = scmp.eq.s32.totalorder %s20, 1
      %p177 = por %p175, %p176
      %p179 = scmp.ne.s32.totalorder %s164, %s178
      %p180 = scmp.eq.s32.totalorder %s20, 0
      %p181 = por %p179, %p180
      %s183 = sadd.s32 %s182, 1
      %p186 = scmp.eq.s32.totalorder %s14, 1
      %p187 = scmp.ne.s32.totalorder %s182, %s184
      %p188 = scmp.eq.s32.totalorder %s14, 0
      %p189 = por %p187, %p188
      %p190 = scmp.ne.s32.totalorder %s182, %s184
      %p191 = scmp.eq.s32.totalorder %s19, 1
      %p192 = por %p190, %p191
      %p193 = scmp.ne.s32.totalorder %s184, %s185
      %p194 = scmp.eq.s32.totalorder %s19, 0
      %p195 = por %p193, %p194
      %p196 = scmp.ne.s32.totalorder %s184, %s185
      %p197 = scmp.eq.s32.totalorder %s20, 1
      %p198 = por %p196, %p197
      %p200 = scmp.ne.s32.totalorder %s185, %s199
      %p201 = scmp.eq.s32.totalorder %s20, 0
      %p202 = por %p200, %p201
      %s203 = ssub.s32 %s21, %s33
      %p204 = scmp.eq.s32.totalorder %s203, 0
      %s206 = sadd.s32 %s205, 1
      %s207 = scalar_select %p204, %s205, %s206
      %p210 = pneg %p204
      %p211 = scmp.eq.s32.totalorder %s14, 1
      %p212 = por %p210, %p211
      %p213 = scmp.ne.s32.totalorder %s205, %s208
      %p214 = scmp.eq.s32.totalorder %s14, 0
      %p215 = por %p213, %p214
      %p216 = scmp.ne.s32.totalorder %s205, %s208
      %p217 = scmp.eq.s32.totalorder %s19, 1
      %p218 = por %p216, %p217
      %p219 = scmp.ne.s32.totalorder %s208, %s209
      %p220 = scmp.eq.s32.totalorder %s19, 0
      %p221 = por %p219, %p220
      %p222 = scmp.ne.s32.totalorder %s208, %s209
      %p223 = scmp.eq.s32.totalorder %s20, 1
      %p224 = por %p222, %p223
      %p226 = scmp.ne.s32.totalorder %s209, %s225
      %p227 = scmp.eq.s32.totalorder %s20, 0
      %p228 = por %p226, %p227
      %p229 = scmp.le.s32.totalorder 1, %s14
      %p230 = scmp.lt.s32.totalorder %s14, 3
      %p231 = pnand %p229, %p230
      %p232 = pneg %p231
      // Predicated region
      $region9: #{fwd.1} parent=5 // pred_check
        _
      $region10: #{fwd.1} parent=5 // pred_check_branch
        %234 = sbr.rel (%p231) target = $region12
      $region11: #{fwd.1} parent=5 // pred_region
        %s235 = ssub.s32 %s14, 1
        // Predicated region
        $region13: #{fwd.1} parent=11 // pred_check
          %p236 = pneg %p80
        $region14: #{fwd.1} parent=11 // pred_check_branch
          %238 = sbr.rel (%p236) target = $region16
        $region15: #{fwd.1} parent=11 // pred_region
          %s239 = smul.u32 2, %s23
          %p240 = scmp.lt.s32.totalorder %s239, 1
          %s241 = scalar_select %p240, %s239, 1
          %s242 = smul.addr %s241, 4
          %s243 = scalar_lea.vmem %s1, %s242
          %s244 = smul.u32 2, %s23
        $region16: #{fwd.1} parent=11 // pred_fallthru
          _
        // Predicated region
        $region17: #{fwd.1} parent=11 // pred_check
          %p245 = pneg %p106
        $region18: #{fwd.1} parent=11 // pred_check_branch
          %247 = sbr.rel (%p245) target = $region20
        $region19: #{fwd.1} parent=11 // pred_region
          %s248 = smul.u32 2, %s23
          %p249 = scmp.lt.s32.totalorder %s248, 1
          %s250 = scalar_select %p249, %s248, 1
          %s251 = smul.addr %s250, 2
          %s252 = smul.addr %s251, 4
          %s253 = scalar_lea.vmem %s2, %s252
          %s254 = smul.u32 2, %s23
        $region20: #{fwd.1} parent=11 // pred_fallthru
          _
        // Predicated region
        $region21: #{fwd.1} parent=11 // pred_check
          %p255 = pneg %p132
        $region22: #{fwd.1} parent=11 // pred_check_branch
          %257 = sbr.rel (%p255) target = $region24
        $region23: #{fwd.1} parent=11 // pred_region
          %s258 = smul.u32 2, %s23
          %p259 = scmp.lt.s32.totalorder %s258, 1
          %s260 = scalar_select %p259, %s258, 1
          %s261 = smul.addr %s260, 4
          %s262 = smul.addr %s261, 4
          %s263 = scalar_lea.vmem %s3, %s262
          %s264 = smul.u32 2, %s23
        $region24: #{fwd.1} parent=11 // pred_fallthru
          _
        // Predicated region
        $region25: #{fwd.1} parent=11 // pred_check
          %p265 = pneg %p153
        $region26: #{fwd.1} parent=11 // pred_check_branch
          %267 = sbr.rel (%p265) target = $region28
        $region27: #{fwd.1} parent=11 // pred_region
          _
        $region28: #{fwd.1} parent=11 // pred_fallthru
          _
        // Predicated region
        $region29: #{fwd.1} parent=11 // pred_check
          %p268 = pneg %p174
        $region30: #{fwd.1} parent=11 // pred_check_branch
          %270 = sbr.rel (%p268) target = $region32
        $region31: #{fwd.1} parent=11 // pred_region
          _
        $region32: #{fwd.1} parent=11 // pred_fallthru
          _
        // Predicated region
        $region33: #{fwd.1} parent=11 // pred_check
          %p271 = pneg %p195
        $region34: #{fwd.1} parent=11 // pred_check_branch
          %273 = sbr.rel (%p271) target = $region36
        $region35: #{fwd.1} parent=11 // pred_region
          _
        $region36: #{fwd.1} parent=11 // pred_fallthru
          _
      $region12: #{fwd.1} parent=5 // pred_fallthru
        _
      %p274 = scmp.lt.s32.totalorder %s14, 2
      // Predicated region
      $region37: #{fwd.1} parent=5 // pred_check
        %p275 = pneg %p274
      $region38: #{fwd.1} parent=5 // pred_check_branch
        %277 = sbr.rel (%p275) target = $region40
      $region39: #{fwd.1} parent=5 // pred_region
        // Predicated region
        $region41: #{fwd.1} parent=39 // pred_check
          %p278 = pneg %p48
        $region42: #{fwd.1} parent=39 // pred_check_branch
          %280 = sbr.rel (%p278) target = $region44
        $region43: #{fwd.1} parent=39 // pred_region
          %s281 = sand.u32 %s38, 1
          %s282 = sand.u32 %s38, 1
          %s283 = smul.addr %s282, 4
          %s284 = scalar_lea.vmem [#allocation3], %s283
          %s285 = smul.u32 2, %s21
          %s286 = smul.addr %s285, 2
          %s287 = sadd.s32 %s22, %s286
          %s288 = smul.addr %s287, 2
          %s289 = scalar_lea.vmem %s0, %s288
          // Predicated region
          $region45: #{fwd.1} parent=43 // pred_check
            _
          $region46: #{fwd.1} parent=43 // pred_check_branch
            %291 = sbr.rel (0) target = $region48
          $region47: #{fwd.1} parent=43 // pred_region
            // Predicated region
            $region49: #{fwd.1} parent=47 // pred_check
              _
            $region50: #{fwd.1} parent=47 // pred_check_branch
              %293 = sbr.rel target = $region52
            $region51: #{fwd.1} parent=47 // pred_region
              // Predicated region
              $region64: #{fwd.1} parent=51 // pred_check
                _
              $region65: #{fwd.1} parent=51 // pred_check_branch
                %311 = sbr.rel (0) target = $region67
              $region66: #{fwd.1} parent=51 // pred_region
                %s313 = ssub.s32 4, 1
                loop: start=0, step=1, limit=1
                $region68: #{fwd.1} parent=66 // loop_pre_header
                  _
                $region69: #{fwd.1} parent=66 // loop_header
                  %s315 = sphi 0, %s319
                  %p316 = scmp.ge.s32.totalorder %s315, 1
                  %s320 = sphi %s289, %s289
                  %s321 = sphi %s284, %s284
                $region70: #{fwd.1} parent=66 // loop_header_branch
                  %318 = sbr.rel (%p316) target = $region74
                $region71: #{fwd.1} parent=66 // loop_body
                  %v322 = vld [vmem:[%s320] sm:%s313]
                  %323 = vst [vmem:[%s321] sm:%s313] %v322
                  %v324 = vld [vmem:[%s320 + $0x4] sm:%s313]
                  %325 = vst [vmem:[%s321 + $0x2] sm:%s313] %v324
                $region72: #{fwd.1} parent=66 // loop_footer
                  %s319 = sadd.s32 1, %s315
                $region73: #{fwd.1} parent=66 // loop_footer_branch
                  %314 = sbr.rel target = $region69
                $region74: #{fwd.1} parent=66 // loop_exit
                  _
              $region67: #{fwd.1} parent=51 // pred_fallthru
                _
            $region52: #{fwd.1} parent=47 // pred_fallthru
              _
            // Predicated region
            $region53: #{fwd.1} parent=47 // pred_check
              _
            $region54: #{fwd.1} parent=47 // pred_check_branch
              %295 = sbr.rel (0) target = $region56
            $region55: #{fwd.1} parent=47 // pred_region
              %s297 = ssub.s32 4, 1
              loop: start=0, step=1, limit=1
              $region57: #{fwd.1} parent=55 // loop_pre_header
                _
              $region58: #{fwd.1} parent=55 // loop_header
                %s299 = sphi 0, %s303
                %p300 = scmp.ge.s32.totalorder %s299, 1
                %s304 = sphi %s289, %s289
                %s305 = sphi %s284, %s284
              $region59: #{fwd.1} parent=55 // loop_header_branch
                %302 = sbr.rel (%p300) target = $region63
              $region60: #{fwd.1} parent=55 // loop_body
                %v306 = vld [vmem:[%s304] sm:%s297]
                %307 = vst [vmem:[%s305] sm:%s297] %v306
                %v308 = vld [vmem:[%s304 + $0x4] sm:%s297]
                %309 = vst [vmem:[%s305 + $0x2] sm:%s297] %v308
              $region61: #{fwd.1} parent=55 // loop_footer
                %s303 = sadd.s32 1, %s299
              $region62: #{fwd.1} parent=55 // loop_footer_branch
                %298 = sbr.rel target = $region58
              $region63: #{fwd.1} parent=55 // loop_exit
                _
            $region56: #{fwd.1} parent=47 // pred_fallthru
              _
          $region48: #{fwd.1} parent=43 // pred_fallthru
            _
          %326 = vnop
        $region44: #{fwd.1} parent=39 // pred_fallthru
          _
      $region40: #{fwd.1} parent=5 // pred_fallthru
        _
      %p327 = scmp.le.s32.totalorder 1, %s14
      %p328 = scmp.lt.s32.totalorder %s14, 3
      %p329 = pnand %p327, %p328
      %p330 = pneg %p329
      // Predicated region
      $region75: #{fwd.1} parent=5 // pred_check
        _
      $region76: #{fwd.1} parent=5 // pred_check_branch
        %332 = sbr.rel (%p329) target = $region78
      $region77: #{fwd.1} parent=5 // pred_region
        %s333 = ssub.s32 %s14, 1
        %s334 = sand.u32 %s41, 1
        %s335 = sand.u32 %s41, 1
        %s336 = smul.addr %s335, 4
        %s337 = scalar_lea.vmem [#allocation3], %s336
        // Predicated region
        $region79: #{fwd.1} parent=77 // pred_check
          %p338 = pneg %p54
        $region80: #{fwd.1} parent=77 // pred_check_branch
          %340 = sbr.rel (%p338) target = $region82
        $region81: #{fwd.1} parent=77 // pred_region
          _
        $region82: #{fwd.1} parent=77 // pred_fallthru
          _
        %s341 = sand.u32 %s41, 1
        %s342 = sand.u32 %s41, 1
        %s343 = smul.addr %s342, 4
        %s344 = scalar_lea.vmem [#allocation3], %s343
        %p345 = pneg %p54
        %p346 = pneg %p51
        %s347 = smul.u32 2, %s23
        %p348 = scmp.lt.s32.totalorder %s347, 1
        %s349 = scalar_select %p348, %s347, 1
        %s350 = smul.addr %s349, 4
        %s351 = scalar_lea.vmem %s1, %s350
        %p352 = pneg %p80
        %p353 = pneg %p77
        %s354 = smul.u32 2, %s23
        %p355 = scmp.lt.s32.totalorder %s354, 1
        %s356 = scalar_select %p355, %s354, 1
        %s357 = smul.addr %s356, 2
        %s358 = smul.addr %s357, 4
        %s359 = scalar_lea.vmem %s2, %s358
        %p360 = pneg %p106
        %p361 = pneg %p103
        %s362 = smul.u32 2, %s23
        %p363 = scmp.lt.s32.totalorder %s362, 1
        %s364 = scalar_select %p363, %s362, 1
        %s365 = smul.addr %s364, 4
        %s366 = smul.addr %s365, 4
        %s367 = scalar_lea.vmem %s3, %s366
        %p368 = pneg %p132
        %p369 = pneg %p129
        %p370 = pneg %p153
        %p371 = pneg %p150
        %p372 = pneg %p174
        %p373 = pneg %p171
        %p374 = pneg %p195
        %p375 = pneg %p192
        %p376 = pneg %p221
        %p377 = pneg %p218
        %s378 = smul.u32 2, %s23
        %s379 = smul.u32 2, %s23
        %p380 = scmp.lt.s32.totalorder %s379, 1
        %s381 = scalar_select %p380, %s379, 1
        %s382 = smul.addr %s381, 4
        %s383 = scalar_lea.vmem %s1, %s382
        %s384 = smul.u32 2, %s23
        %s385 = smul.u32 2, %s23
        %p386 = scmp.lt.s32.totalorder %s385, 1
        %s387 = scalar_select %p386, %s385, 1
        %s388 = smul.addr %s387, 2
        %s389 = smul.addr %s388, 4
        %s390 = scalar_lea.vmem %s2, %s389
        %s391 = smul.u32 2, %s23
        %s392 = smul.u32 2, %s23
        %p393 = scmp.lt.s32.totalorder %s392, 1
        %s394 = scalar_select %p393, %s392, 1
        %s395 = smul.addr %s394, 4
        %s396 = smul.addr %s395, 4
        %s397 = scalar_lea.vmem %s3, %s396
        %s398 = smul.u32 2, %s23
        %p399 = scmp.eq.s32.totalorder %s24, 0
        // Predicated region
        $region83: #{fwd.1} parent=77 // pred_check
          %p400 = pneg %p399
        $region84: #{fwd.1} parent=77 // pred_check_branch
          %402 = sbr.rel (%p400) target = $region86
        $region85: #{fwd.1} parent=77 // pred_region
          %v403 = vld [vmem:[%s337] sm:$0x3]
          %v404 = vld [vmem:[%s337 + $0x2] sm:$0x3]
          %v405 = vunpack.c.l.bf16 %v403
          %v406 = vunpack.c.l.bf16 %v404
          %vm407 = vcmask 1043456
          %v408 = vsel %vm407, %v405, 0.0
          %409 = vadd.xlane.f32.xlu0 %v408
          %v410 = vpop.xlane.xlu0 %409
          %v411 = vsel %vm407, %v406, 0.0
          %412 = vadd.xlane.f32.xlu0 %v411
          %v413 = vpop.xlane.xlu0 %412
          %v416 = vlaneseq
          %v417 = vand.u32 %v416, 127
          %v418 = vlaneseq
          %v419 = vshrl.u32 %v418, 7
          %v420 = vsub.s32 %v417, %v419
          %v421 = vrot.slane %v410, %v420
          %v422 = vlaneseq
          %v423 = vshrl.u32 %v422, 7
          %v424 = vsub.s32 %v417, %v423
          %v425 = vrot.slane %v413, %v424
          %vm426 = vcmask 1041409
          %v427 = vsel %vm426, %v425, %v421
          %vm429 = vcmask 25600
          %430 = vst.msk [vmem:[#allocation2] sm:$0x3] %vm429, %v427
          %v431 = vld [vmem:[%s383] sm:$0xf]
          %v432 = vld [vmem:[%s383 + $0x4] sm:$0xf]
          %v433 = vunpack.c.l.bf16 %v431
          %v434 = vunpack.c.l.bf16 %v432
          %vm435 = vcmask 523264
          %v436 = vsel %vm435, %v433, 0.0
          %437 = vadd.xlane.f32.xlu0 %v436
          %v438 = vpop.xlane.xlu0 %437
          %v439 = vsel %vm435, %v434, 0.0
          %440 = vadd.xlane.f32.xlu0 %v439
          %v441 = vpop.xlane.xlu0 %440
          %v444 = vadd.s32 %v417, 4294967292
          %v445 = vlaneseq
          %v446 = vshrl.u32 %v445, 7
          %v447 = vsub.s32 %v444, %v446
          %v448 = vrot.slane %v438, %v447
          %v449 = vlaneseq
          %v450 = vshrl.u32 %v449, 7
          %v451 = vsub.s32 %v444, %v450
          %v452 = vrot.slane %v441, %v451
          %v453 = vsel %vm426, %v452, %v448
          %vm455 = vcmask 91168
          %456 = vst.msk [vmem:[#allocation2] sm:$0x3] %vm455, %v453
          %v457 = vld [vmem:[%s390] sm:$0xf]
          %v458 = vld [vmem:[%s390 + $0x4] sm:$0xf]
          %v459 = vld [vmem:[%s390 + $0x8] sm:$0xf]
          %v460 = vld [vmem:[%s390 + $0xc] sm:$0xf]
          %v461 = vunpack.c.l.bf16 %v457
          %v462 = vunpack.c.l.bf16 %v458
          %v463 = vunpack.c.l.bf16 %v459
          %v464 = vunpack.c.l.bf16 %v460
          %vm465 = vcmask 130048
          %v466 = vsel %vm465, %v461, 0.0
          %467 = vadd.xlane.f32.xlu0 %v466
          %v468 = vpop.xlane.xlu0 %467
          %v469 = vsel %vm465, %v462, 0.0
          %470 = vadd.xlane.f32.xlu0 %v469
          %v471 = vpop.xlane.xlu0 %470
          %v472 = vsel %vm465, %v463, 0.0
          %473 = vadd.xlane.f32.xlu0 %v472
          %v474 = vpop.xlane.xlu0 %473
          %v475 = vsel %vm465, %v464, 0.0
          %476 = vadd.xlane.f32.xlu0 %v475
          %v477 = vpop.xlane.xlu0 %476
          %v482 = vadd.s32 %v417, 4294967284
          %v483 = vlaneseq
          %v484 = vshrl.u32 %v483, 7
          %v485 = vsub.s32 %v482, %v484
          %v486 = vrot.slane %v468, %v485
          %v487 = vadd.s32 %v417, 4294967276
          %v488 = vlaneseq
          %v489 = vshrl.u32 %v488, 7
          %v490 = vsub.s32 %v487, %v489
          %v491 = vrot.slane %v471, %v490
          %vm492 = vcmask 228512
          %v493 = vsel %vm492, %v491, %v486
          %v494 = vlaneseq
          %v495 = vshrl.u32 %v494, 7
          %v496 = vsub.s32 %v482, %v495
          %v497 = vrot.slane %v474, %v496
          %v498 = vlaneseq
          %v499 = vshrl.u32 %v498, 7
          %v500 = vsub.s32 %v487, %v499
          %v501 = vrot.slane %v477, %v500
          %v502 = vsel %vm492, %v501, %v497
          %v503 = vsel %vm426, %v502, %v493
          %vm505 = vcmask 222304
          %506 = vst.msk [vmem:[#allocation2] sm:$0x3] %vm505, %v503
          %v507 = vld [vmem:[%s397] sm:$0xf]
          %v508 = vld [vmem:[%s397 + $0x4] sm:$0xf]
          %v509 = vld [vmem:[%s397 + $0x8] sm:$0xf]
          %v510 = vld [vmem:[%s397 + $0xc] sm:$0xf]
          %v511 = vld [vmem:[%s397 + $0x10] sm:$0xf]
          %v512 = vld [vmem:[%s397 + $0x14] sm:$0xf]
          %v513 = vld [vmem:[%s397 + $0x18] sm:$0xf]
          %v514 = vld [vmem:[%s397 + $0x1c] sm:$0xf]
          %v515 = vunpack.c.l.bf16 %v507
          %v516 = vunpack.c.l.bf16 %v508
          %v517 = vunpack.c.l.bf16 %v509
          %v518 = vunpack.c.l.bf16 %v510
          %v519 = vunpack.c.l.bf16 %v511
          %v520 = vunpack.c.l.bf16 %v512
          %v521 = vunpack.c.l.bf16 %v513
          %v522 = vunpack.c.l.bf16 %v514
          %vm523 = vcmask 31744
          %v524 = vsel %vm523, %v515, 0.0
          %525 = vadd.xlane.f32.xlu0 %v524
          %v526 = vpop.xlane.xlu0 %525
          %v527 = vsel %vm523, %v516, 0.0
          %528 = vadd.xlane.f32.xlu0 %v527
          %v529 = vpop.xlane.xlu0 %528
          %v530 = vsel %vm523, %v517, 0.0
          %531 = vadd.xlane.f32.xlu0 %v530
          %v532 = vpop.xlane.xlu0 %531
          %v533 = vsel %vm523, %v518, 0.0
          %534 = vadd.xlane.f32.xlu0 %v533
          %v535 = vpop.xlane.xlu0 %534
          %v536 = vsel %vm523, %v519, 0.0
          %537 = vadd.xlane.f32.xlu0 %v536
          %v538 = vpop.xlane.xlu0 %537
          %v539 = vsel %vm523, %v520, 0.0
          %540 = vadd.xlane.f32.xlu0 %v539
          %v541 = vpop.xlane.xlu0 %540
          %v542 = vsel %vm523, %v521, 0.0
          %543 = vadd.xlane.f32.xlu0 %v542
          %v544 = vpop.xlane.xlu0 %543
          %v545 = vsel %vm523, %v522, 0.0
          %546 = vadd.xlane.f32.xlu0 %v545
          %v547 = vpop.xlane.xlu0 %546
          %v556 = vadd.s32 %v417, 4294967268
          %v557 = vlaneseq
          %v558 = vshrl.u32 %v557, 7
          %v559 = vsub.s32 %v556, %v558
          %v560 = vrot.slane %v526, %v559
          %v561 = vadd.s32 %v417, 4294967260
          %v562 = vlaneseq
          %v563 = vshrl.u32 %v562, 7
          %v564 = vsub.s32 %v561, %v563
          %v565 = vrot.slane %v529, %v564
          %vm566 = vcmask 359712
          %v567 = vsel %vm566, %v565, %v560
          %v568 = vadd.s32 %v417, 4294967252
          %v569 = vlaneseq
          %v570 = vshrl.u32 %v569, 7
          %v571 = vsub.s32 %v568, %v570
          %v572 = vrot.slane %v532, %v571
          %vm573 = vcmask 425312
          %v574 = vsel %vm573, %v572, %v567
          %v575 = vadd.s32 %v417, 4294967244
          %v576 = vlaneseq
          %v577 = vshrl.u32 %v576, 7
          %v578 = vsub.s32 %v575, %v577
          %v579 = vrot.slane %v535, %v578
          %vm580 = vcmask 490912
          %v581 = vsel %vm580, %v579, %v574
          %v582 = vlaneseq
          %v583 = vshrl.u32 %v582, 7
          %v584 = vsub.s32 %v556, %v583
          %v585 = vrot.slane %v538, %v584
          %v586 = vlaneseq
          %v587 = vshrl.u32 %v586, 7
          %v588 = vsub.s32 %v561, %v587
          %v589 = vrot.slane %v541, %v588
          %v590 = vsel %vm566, %v589, %v585
          %v591 = vlaneseq
          %v592 = vshrl.u32 %v591, 7
          %v593 = vsub.s32 %v568, %v592
          %v594 = vrot.slane %v544, %v593
          %v595 = vsel %vm573, %v594, %v590
          %v596 = vlaneseq
          %v597 = vshrl.u32 %v596, 7
          %v598 = vsub.s32 %v575, %v597
          %v599 = vrot.slane %v547, %v598
          %v600 = vsel %vm580, %v599, %v595
          %v601 = vsel %vm426, %v600, %v581
          %vm603 = vcmask 484576
          %604 = vst.msk [vmem:[#allocation2] sm:$0x3] %vm603, %v601
        $region86: #{fwd.1} parent=77 // pred_fallthru
          _
        %p605 = scmp.gt.s32.totalorder %s24, 0
        // Predicated region
        $region87: #{fwd.1} parent=77 // pred_check
          %p606 = pneg %p605
        $region88: #{fwd.1} parent=77 // pred_check_branch
          %608 = sbr.rel (%p606) target = $region90
        $region89: #{fwd.1} parent=77 // pred_region
          %v609 = vld [vmem:[%s337] sm:$0x3]
          %v610 = vld [vmem:[%s337 + $0x2] sm:$0x3]
          %v611 = vunpack.c.l.bf16 %v609
          %v612 = vunpack.c.l.bf16 %v610
          %vm613 = vcmask 1043456
          %v614 = vsel %vm613, %v611, 0.0
          %615 = vadd.xlane.f32.xlu0 %v614
          %v616 = vpop.xlane.xlu0 %615
          %v617 = vsel %vm613, %v612, 0.0
          %618 = vadd.xlane.f32.xlu0 %v617
          %v619 = vpop.xlane.xlu0 %618
          %v620 = vld [vmem:[#allocation2] sm:$0x3]
          %v623 = vlaneseq
          %v624 = vand.u32 %v623, 127
          %v625 = vlaneseq
          %v626 = vshrl.u32 %v625, 7
          %v627 = vsub.s32 %v624, %v626
          %v628 = vrot.slane %v616, %v627
          %v629 = vlaneseq
          %v630 = vshrl.u32 %v629, 7
          %v631 = vsub.s32 %v624, %v630
          %v632 = vrot.slane %v619, %v631
          %vm633 = vcmask 1041409
          %v634 = vsel %vm633, %v632, %v628
          %v636 = vadd.f32 %v620, %v634
          %vm637 = vcmask 25600
          %638 = vst.msk [vmem:[#allocation2] sm:$0x3] %vm637, %v636
        $region90: #{fwd.1} parent=77 // pred_fallthru
          _
        %p639 = scmp.eq.s32.totalorder %s24, 1
        // Predicated region
        $region91: #{fwd.1} parent=77 // pred_check
          %p640 = pneg %p639
        $region92: #{fwd.1} parent=77 // pred_check_branch
          %642 = sbr.rel (%p640) target = $region94
        $region93: #{fwd.1} parent=77 // pred_region
          %v643 = vld [vmem:[#allocation2] sm:$0x3]
          %v644 = vld [vmem:[%s6] sm:$0x1]
          %v646 = vlaneseq
          %v647 = vshrl.u32 %v646, 7
          %v648 = vsub.s32 0, %v647
          %v649 = vrot.slane %v644, %v648
          %v651 = vmul.f32 %v643, %v649
          %v652 = vld [vmem:[%s4] sm:$0xff]
          %v653 = vld [vmem:[%s4 + $0x8] sm:$0xff]
          %v654 = vld [vmem:[%s4 + $0x10] sm:$0xff]
          %v655 = vld [vmem:[%s4 + $0x18] sm:$0xff]
          %v656 = vld [vmem:[%s4 + $0x20] sm:$0xff]
          %v657 = vld [vmem:[%s4 + $0x28] sm:$0xff]
          %v658 = vld [vmem:[%s4 + $0x30] sm:$0xff]
          %v659 = vld [vmem:[%s4 + $0x38] sm:$0xf]
          %v660 = vld [vmem:[%s5] sm:$0x1]
          %v662 = vlaneseq
          %v663 = vshrl.u32 %v662, 7
          %v664 = vsub.s32 0, %v663
          %v665 = vrot.slane %v660, %v664
          %vm667 = vcmask 490496
          %v669 = vsel %vm667, %v651, 0
          %vm671 = vcmask 1043456
          %v673 = vsel %vm671, %v659, 0
          %675 = vmatprep.subr.mxu0 0.0
          %676 = vmatpush1.msra.mxu0 0.0
          %677 = vmatprep.subr.mxu0 0.0
          %678 = vmatpush1.msra.mxu0 0.0
          %679 = vmatprep.subr.mxu0 0.0
          %680 = vmatpush1.msra.mxu0 0.0
          %681 = vmatprep.subr.mxu0 0.0
          %682 = vmatpush1.msra.mxu0 0.0
          %683 = vmatprep.subr.mxu0 0.0
          %684 = vmatpush1.msra.mxu0 0.0
          %685 = vmatprep.subr.mxu0 0.0
          %686 = vmatpush1.msra.mxu0 0.0
          %687 = vmatprep.subr.mxu0 0.0
          %688 = vmatpush1.msra.mxu0 0.0
          %689 = vmatprep.subr.mxu0 0.0
          %690 = vmatpush1.msra.mxu0 0.0
          %691 = vmatprep.subr.mxu0 0.0
          %692 = vmatpush1.msra.mxu0 %v673
          %693 = vmatprep.subr.mxu0 0.0
          %694 = vmatpush1.msra.mxu0 %v658
          %695 = vmatprep.subr.mxu0 0.0
          %696 = vmatpush1.msra.mxu0 %v657
          %697 = vmatprep.subr.mxu0 0.0
          %698 = vmatpush1.msra.mxu0 %v656
          %699 = vmatprep.subr.mxu0 0.0
          %700 = vmatpush1.msra.mxu0 %v655
          %701 = vmatprep.subr.mxu0 0.0
          %702 = vmatpush1.msra.mxu0 %v654
          %703 = vmatprep.subr.mxu0 0.0
          %704 = vmatpush1.msra.mxu0 %v653
          %705 = vmatprep.subr.mxu0 0.0
          %706 = vmatpush1.msra.mxu0 %v652
          %707 = vmatprep.subr.mxu0 0.0
          %708 = vmatpush2.msra.mxu0 0.0
          %709 = vmatprep.subr.mxu0 0.0
          %710 = vmatpush2.msra.mxu0 0.0
          %711 = vmatprep.subr.mxu0 0.0
          %712 = vmatpush2.msra.mxu0 0.0
          %713 = vmatprep.subr.mxu0 0.0
          %714 = vmatpush2.msra.mxu0 0.0
          %715 = vmatprep.subr.mxu0 0.0
          %716 = vmatpush2.msra.mxu0 0.0
          %717 = vmatprep.subr.mxu0 0.0
          %718 = vmatpush2.msra.mxu0 0.0
          %719 = vmatprep.subr.mxu0 0.0
          %720 = vmatpush2.msra.mxu0 0.0
          %721 = vmatprep.subr.mxu0 0.0
          %722 = vmatpush2.msra.mxu0 0.0
          %723 = vmatprep.subr.mxu0 0.0
          %724 = vmatpush2.msra.mxu0 0.0
          %725 = vmatprep.subr.mxu0 0.0
          %726 = vmatpush2.msra.mxu0 0.0
          %727 = vmatprep.subr.mxu0 0.0
          %728 = vmatpush2.msra.mxu0 0.0
          %729 = vmatprep.subr.mxu0 0.0
          %730 = vmatpush2.msra.mxu0 0.0
          %731 = vmatprep.subr.mxu0 0.0
          %732 = vmatpush2.msra.mxu0 0.0
          %733 = vmatprep.subr.mxu0 0.0
          %734 = vmatpush2.msra.mxu0 0.0
          %735 = vmatprep.subr.mxu0 0.0
          %736 = vmatpush2.msra.mxu0 0.0
          %737 = vmatprep.subr.mxu0 0.0
          %738 = vmatpush2.msra.mxu0 0.0
          %739 = vmatprep.mubr.f32.mxu0 0.0
          %740 = vmatmul.mubr.f32.gmra.mxu0 %v669
          %v741 = vpop.f32.mrf.mxu0
          %v742 = vadd.f32 %v665, %v741
          %v743 = vpop.f32.mrf.mxu0
          %744 = vdwg.mxu0
          %745 = vst [vmem:[#allocation4] sm:$0x3] %v742
        $region94: #{fwd.1} parent=77 // pred_fallthru
          _
        // Predicated region
        $region95: #{fwd.1} parent=77 // pred_check
          %p746 = pneg %p218
        $region96: #{fwd.1} parent=77 // pred_check_branch
          %748 = sbr.rel (%p746) target = $region98
        $region97: #{fwd.1} parent=77 // pred_region
          %s750 = ssub.s32 32, 32
          %751 = vsyncadd [#allocation5], %s750
          %s752 = smul.addr %s23, 32
          %s753 = scalar_lea.hbm %s7, %s752
          %s755 = sshll.u32 [#allocation4], 4
          %s756 = int_to_ptr.vmem [resolvable:$true] %s755
          %758 = dma.vmem_to_hbm [thread:$0]  %s756, 32, %s753, [#allocation5]
        $region98: #{fwd.1} parent=77 // pred_fallthru
          _
        // Predicated region
        $region99: #{fwd.1} parent=77 // pred_check
          %p759 = pneg %p218
        $region100: #{fwd.1} parent=77 // pred_check_branch
          %761 = sbr.rel (%p759) target = $region102
        $region101: #{fwd.1} parent=77 // pred_region
          %762 = dma.done [#allocation5], 32
        $region102: #{fwd.1} parent=77 // pred_fallthru
          _
      $region78: #{fwd.1} parent=5 // pred_fallthru
        _
      %p763 = scmp.le.s32.totalorder 2, %s14
      // Predicated region
      $region103: #{fwd.1} parent=5 // pred_check
        %p764 = pneg %p763
      $region104: #{fwd.1} parent=5 // pred_check_branch
        %766 = sbr.rel (%p764) target = $region106
      $region105: #{fwd.1} parent=5 // pred_region
        %s767 = ssub.s32 %s14, 2
      $region106: #{fwd.1} parent=5 // pred_fallthru
        _
    $region6: #{fwd.1} parent=1 // loop_footer
      %s18 = sadd.s32 1, %s14
    $region7: #{fwd.1} parent=1 // loop_footer_branch
      %13 = sbr.rel target = $region3
    $region8: #{fwd.1} parent=1 // loop_exit
      _
    %768 = vsyncpa [#allocation5], 1
    %s769 = scalar_lea.sflag [#allocation5], 1
    %770 = vsyncpa %s769, 1

</llo_original>
